<compile_context>
chip_gen: v6e
topology: v6e:2x2x1
jax: 0.10.0
libtpu: 0.0.40
codegen_flags: <defaults>
</compile_context>

<pallas_src>
import functools

import jax
import jax.numpy as jnp
from jax.experimental import pallas as pl
from jax.experimental.pallas import tpu as pltpu


def _round_up(x: int, m: int) -> int:
    return ((x + m - 1) // m) * m


def qnet_kernel(xt_ref, w1_ref, b1_ref, w2_ref, b2_ref, out_ref):
    """One lane-dense batch tile of the transposed QNet forward."""
    cdt = w1_ref.dtype                                   # compute dtype (f32 here)
    x = xt_ref[...].astype(cdt)                          # [obs_dim, tb]
    h = jnp.dot(w1_ref[...], x,
                preferred_element_type=jnp.float32)      # [hidden, tb]
    h = jnp.maximum(h + b1_ref[...], 0.0)
    q = jnp.dot(w2_ref[...], h.astype(cdt),
                preferred_element_type=jnp.float32)      # [action, tb]
    out_ref[...] = (q + b2_ref[...]).astype(out_ref.dtype)


def prepare_qnet_params(w1, b1, w2, b2):
    """One-time parameter prep (call OUTSIDE the hot loop).

    Weights keep PyTorch layout: w1 [hidden, obs], w2 [action, hidden].
    Biases become column vectors ([out, 1]) for the transposed/lane-dense layout.
    """
    return (w1.astype(jnp.float32),
            b1.reshape(-1, 1).astype(jnp.float32),
            w2.astype(jnp.float32),
            b2.reshape(-1, 1).astype(jnp.float32))


@functools.partial(jax.jit, static_argnames=("batch_tile",))
def qnet_forward_t(obs_t, w1, b1, w2, b2, *, batch_tile=4096):
    """Lane-dense entry point.

    obs_t: [obs_dim, batch] (batch on the lane axis; f32 or bf16).
    Returns q_t: [action_dim, batch] (f32).
    """
    obs_dim, batch = obs_t.shape
    hidden_dim = w1.shape[0]
    action_dim = w2.shape[0]

    if batch <= 256:
        tb = batch                                     # single full-extent block
    else:
        # >= 2 grid steps (so v7x's two TensorCores both get work), tile a
        # multiple of 128 lanes; the partial edge block (batch % tb) is handled
        # by Pallas (masked OOB output writes).
        tb = max(128, min(batch_tile, _round_up(pl.cdiv(batch, 2), 128)))
    grid = (pl.cdiv(batch, tb),)

    flops = 2 * batch * (obs_dim * hidden_dim + hidden_dim * action_dim)
    bytes_accessed = (obs_t.size * obs_t.dtype.itemsize
                      + w1.size * w1.dtype.itemsize + b1.size * b1.dtype.itemsize
                      + w2.size * w2.dtype.itemsize + b2.size * b2.dtype.itemsize
                      + batch * action_dim * 4)

    return pl.pallas_call(
        qnet_kernel,
        out_shape=jax.ShapeDtypeStruct((action_dim, batch), jnp.float32),
        grid_spec=pltpu.PrefetchScalarGridSpec(
            num_scalar_prefetch=0,
            grid=grid,
            in_specs=[
                pl.BlockSpec((obs_dim, tb), lambda i: (0, i)),             # x tile (lane-dense)
                pl.BlockSpec((hidden_dim, obs_dim), lambda i: (0, 0)),     # W1 resident
                pl.BlockSpec((hidden_dim, 1), lambda i: (0, 0)),           # b1 resident
                pl.BlockSpec((action_dim, hidden_dim), lambda i: (0, 0)),  # W2 resident
                pl.BlockSpec((action_dim, 1), lambda i: (0, 0)),           # b2 resident
            ],
            out_specs=pl.BlockSpec((action_dim, tb), lambda i: (0, i)),
        ),
        compiler_params=pltpu.CompilerParams(
            dimension_semantics=("parallel",)),
        cost_estimate=pl.CostEstimate(
            flops=flops, transcendentals=0, bytes_accessed=bytes_accessed),
    )(obs_t, w1, b1, w2, b2)


@functools.partial(jax.jit, static_argnames=("batch_tile",))
def qnet_forward(observation, w1, b1, w2, b2, *, batch_tile=4096):
    """PyTorch-layout wrapper: observation [B, obs_dim] -> Q-values [B, action_dim].

    Transposes x/out once each way; emit observations as [obs_dim, B] upstream
    and call qnet_forward_t directly to avoid the extra pass over x.
    """
    q_t = qnet_forward_t(observation.T, w1, b1, w2, b2, batch_tile=batch_tile)
    return q_t.T


def init_qnet_params(key, observation_dim, hidden_dim, action_dim):
    """Deterministic init mimicking PyTorch nn.Linear defaults."""
    k1, k2, k3, k4 = jax.random.split(key, 4)
    bound1 = 1.0 / jnp.sqrt(observation_dim)
    bound2 = 1.0 / jnp.sqrt(hidden_dim)
    w1 = jax.random.uniform(k1, (hidden_dim, observation_dim),
                            jnp.float32, -bound1, bound1)
    b1 = jax.random.uniform(k2, (hidden_dim,), jnp.float32, -bound1, bound1)
    w2 = jax.random.uniform(k3, (action_dim, hidden_dim),
                            jnp.float32, -bound2, bound2)
    b2 = jax.random.uniform(k4, (hidden_dim,) if False else (action_dim,),
                            jnp.float32, -bound2, bound2)
    return w1, b1, w2, b2


if __name__ == "__main__":
    key = jax.random.PRNGKey(0)
    k_params, k_obs, k_obs2 = jax.random.split(key, 3)

    observation_dim, hidden_dim, action_dim = 8, 32, 4
    w1, b1, w2, b2 = init_qnet_params(k_params, observation_dim,
                                      hidden_dim, action_dim)
    params = prepare_qnet_params(w1, b1, w2, b2)   # one-time prep, not per call

    def ref_forward(obs):
        return jnp.maximum(obs @ w1.T + b1, 0.0) @ w2.T + b2

    # Small demo shape (batch=2) -> single full-extent block.
    obs_small = jax.random.normal(k_obs, (2, observation_dim), dtype=jnp.float32)
    q_small = qnet_forward(obs_small, *params)
    jax.block_until_ready(q_small)
    assert q_small.shape == (2, action_dim)
    assert jnp.allclose(q_small, ref_forward(obs_small), atol=1e-3, rtol=1e-3), \
        "mismatch vs reference (small batch)"

    # Larger batch: 2 grid steps + a partial edge block (no wrapper-side pad).
    obs_big = jax.random.normal(k_obs2, (300, observation_dim), dtype=jnp.float32)
    q_big = qnet_forward(obs_big, *params)
    jax.block_until_ready(q_big)
    assert q_big.shape == (300, action_dim)
    assert jnp.allclose(q_big, ref_forward(obs_big), atol=1e-3, rtol=1e-3), \
        "mismatch vs reference (tiled batch + edge block)"

    # Optional bf16 observation stream (halves the dominant HBM read traffic);
    # kernel upcasts to f32 and accumulates in f32.
    q_bf16 = qnet_forward(obs_big.astype(jnp.bfloat16), *params)
    jax.block_until_ready(q_bf16)
    assert jnp.allclose(q_bf16, ref_forward(obs_big), atol=5e-2, rtol=5e-2), \
        "mismatch vs reference (bf16 observations)"

    print("KERNEL_OK")
</pallas_src>

<mosaic_0001>
module attributes {stable_mosaic.version = 11 : i64} {
  func.func @qnet_kernel(%arg0: i32, %arg1: memref<8x2xf32, #tpu.memory_space<vmem>>, %arg2: memref<32x8xf32, #tpu.memory_space<vmem>>, %arg3: memref<32x1xf32, #tpu.memory_space<vmem>>, %arg4: memref<4x32xf32, #tpu.memory_space<vmem>>, %arg5: memref<4x1xf32, #tpu.memory_space<vmem>>, %arg6: memref<4x2xf32, #tpu.memory_space<vmem>>) attributes {dimension_semantics = [#tpu.dimension_semantics<parallel>], iteration_bounds = array<i64: 1>, scalar_prefetch = 0 : i64, scratch_operands = 0 : i64, tpu.core_type = #tpu.core_type<tc>, window_params = [{transform_indices = @transform_0, window_bounds = array<i64: 8, 2>}, {pipeline_mode = #tpu.pipeline_mode<synchronous>, transform_indices = @transform_1, window_bounds = array<i64: 32, 8>}, {pipeline_mode = #tpu.pipeline_mode<synchronous>, transform_indices = @transform_2, window_bounds = array<i64: 32, 1>}, {pipeline_mode = #tpu.pipeline_mode<synchronous>, transform_indices = @transform_3, window_bounds = array<i64: 4, 32>}, {pipeline_mode = #tpu.pipeline_mode<synchronous>, transform_indices = @transform_4, window_bounds = array<i64: 4, 1>}, {transform_indices = @transform_5, window_bounds = array<i64: 4, 2>}]} {
    %c0 = arith.constant 0 : index
    %c0_0 = arith.constant 0 : index
    %0 = vector.load %arg1[%c0, %c0_0] : memref<8x2xf32, #tpu.memory_space<vmem>>, vector<8x2xf32>
    %c0_1 = arith.constant 0 : index
    %c0_2 = arith.constant 0 : index
    %1 = vector.load %arg2[%c0_1, %c0_2] : memref<32x8xf32, #tpu.memory_space<vmem>>, vector<32x8xf32>
    %cst = arith.constant dense<0.000000e+00> : vector<32x2xf32>
    %2 = tpu.matmul %1, %0, %cst {dimension_numbers = #tpu.dot_dimension_numbers<[1], [0], [0], [1], [0, 0, 1, 1], [], []>} : vector<32x8xf32>, vector<8x2xf32>, vector<32x2xf32> -> vector<32x2xf32>
    %c0_3 = arith.constant 0 : index
    %c0_4 = arith.constant 0 : index
    %3 = vector.load %arg3[%c0_3, %c0_4] : memref<32x1xf32, #tpu.memory_space<vmem>>, vector<32x1xf32>
    %4 = vector.broadcast %3 : vector<32x1xf32> to vector<32x2xf32>
    %5 = arith.addf %2, %4 : vector<32x2xf32>
    %cst_5 = arith.constant 0.000000e+00 : f32
    %6 = vector.broadcast %cst_5 : f32 to vector<32x2xf32>
    %7 = arith.maximumf %5, %6 : vector<32x2xf32>
    %c0_6 = arith.constant 0 : index
    %c0_7 = arith.constant 0 : index
    %8 = vector.load %arg4[%c0_6, %c0_7] : memref<4x32xf32, #tpu.memory_space<vmem>>, vector<4x32xf32>
    %cst_8 = arith.constant dense<0.000000e+00> : vector<4x2xf32>
    %9 = tpu.matmul %8, %7, %cst_8 {dimension_numbers = #tpu.dot_dimension_numbers<[1], [0], [0], [1], [0, 0, 1, 1], [], []>} : vector<4x32xf32>, vector<32x2xf32>, vector<4x2xf32> -> vector<4x2xf32>
    %c0_9 = arith.constant 0 : index
    %c0_10 = arith.constant 0 : index
    %10 = vector.load %arg5[%c0_9, %c0_10] : memref<4x1xf32, #tpu.memory_space<vmem>>, vector<4x1xf32>
    %11 = vector.broadcast %10 : vector<4x1xf32> to vector<4x2xf32>
    %12 = arith.addf %9, %11 : vector<4x2xf32>
    %c0_11 = arith.constant 0 : index
    %c0_12 = arith.constant 0 : index
    %13 = vector.load %arg6[%c0_11, %c0_12] : memref<4x2xf32, #tpu.memory_space<vmem>>, vector<4x2xf32>
    tpu.vector_store %arg6[%c0_11, %c0_12], %12 {strides = array<i32>} : memref<4x2xf32, #tpu.memory_space<vmem>>, vector<4x2xf32>,
    return
  }
  func.func @transform_0(%arg0: i32) -> (i32, i32) {
    %c0_i32 = arith.constant 0 : i32
    %c0_i32_0 = arith.constant 0 : i32
    return %c0_i32, %arg0 : i32, i32
  }
  func.func @transform_1(%arg0: i32) -> (i32, i32) {
    %c0_i32 = arith.constant 0 : i32
    %c0_i32_0 = arith.constant 0 : i32
    %c0_i32_1 = arith.constant 0 : i32
    return %c0_i32, %c0_i32_0 : i32, i32
  }
  func.func @transform_2(%arg0: i32) -> (i32, i32) {
    %c0_i32 = arith.constant 0 : i32
    %c0_i32_0 = arith.constant 0 : i32
    %c0_i32_1 = arith.constant 0 : i32
    return %c0_i32, %c0_i32_0 : i32, i32
  }
  func.func @transform_3(%arg0: i32) -> (i32, i32) {
    %c0_i32 = arith.constant 0 : i32
    %c0_i32_0 = arith.constant 0 : i32
    %c0_i32_1 = arith.constant 0 : i32
    return %c0_i32, %c0_i32_0 : i32, i32
  }
  func.func @transform_4(%arg0: i32) -> (i32, i32) {
    %c0_i32 = arith.constant 0 : i32
    %c0_i32_0 = arith.constant 0 : i32
    %c0_i32_1 = arith.constant 0 : i32
    return %c0_i32, %c0_i32_0 : i32, i32
  }
  func.func @transform_5(%arg0: i32) -> (i32, i32) {
    %c0_i32 = arith.constant 0 : i32
    %c0_i32_0 = arith.constant 0 : i32
    return %c0_i32, %arg0 : i32, i32
  }
}

</mosaic_0001>

<llo_original>
// kernel: qnet_forward_t.1
$region0: #{qnet_forward_t.1}
  #allocation0 [shape = 'u32[]', space=smem, size = 0x4, offset = 0x4, fixed_abs, tag = 'smem constant byte address 0x4 - core index']
  #allocation1 [shape = 'u32[144,128]{1,0:T(1,128)}', space=vmem, size = 0x12000, scoped, tag = 'internal scratch']
  %s0 = inlined_call_operand.vmem [shape: f32[8,2], index: 0, kind: input, shape index: {}]
  %s1 = inlined_call_operand.vmem [shape: f32[32,8], index: 1, kind: input, shape index: {}]
  %s2 = inlined_call_operand.vmem [shape: f32[32,1], index: 2, kind: input, shape index: {}]
  %s3 = inlined_call_operand.vmem [shape: f32[4,32], index: 3, kind: input, shape index: {}]
  %s4 = inlined_call_operand.vmem [shape: f32[4,1], index: 4, kind: input, shape index: {}]
  %s5 = inlined_call_operand.vmem [shape: f32[4,2], index: 5, kind: output, shape index: {}]
  %s6 = sld [smem:[#allocation0]]
  $region30: #{qnet_forward_t.1} parent=0
    _
  %s8 = ssub.s32 1, %s6
  %s9 = scalar_select 0, %s8, %s6
  // Predicated region
  $region2: #{qnet_forward_t.1} parent=0 // pred_check
    _
  $region3: #{qnet_forward_t.1} parent=0 // pred_check_branch
    %11 = sbr.rel (0) target = $region5
  $region4: #{qnet_forward_t.1} parent=0 // pred_region
    _
  $region5: #{qnet_forward_t.1} parent=0 // pred_fallthru
    _
  // Predicated region
  $region6: #{qnet_forward_t.1} parent=0 // pred_check
    _
  $region7: #{qnet_forward_t.1} parent=0 // pred_check_branch
    %13 = sbr.rel (0) target = $region9
  $region8: #{qnet_forward_t.1} parent=0 // pred_region
    _
  $region9: #{qnet_forward_t.1} parent=0 // pred_fallthru
    _
  // Predicated region
  $region10: #{qnet_forward_t.1} parent=0 // pred_check
    _
  $region11: #{qnet_forward_t.1} parent=0 // pred_check_branch
    %15 = sbr.rel (0) target = $region13
  $region12: #{qnet_forward_t.1} parent=0 // pred_region
    _
  $region13: #{qnet_forward_t.1} parent=0 // pred_fallthru
    _
  // Predicated region
  $region14: #{qnet_forward_t.1} parent=0 // pred_check
    _
  $region15: #{qnet_forward_t.1} parent=0 // pred_check_branch
    %17 = sbr.rel (0) target = $region17
  $region16: #{qnet_forward_t.1} parent=0 // pred_region
    _
  $region17: #{qnet_forward_t.1} parent=0 // pred_fallthru
    _
  // Predicated region
  $region18: #{qnet_forward_t.1} parent=0 // pred_check
    _
  $region19: #{qnet_forward_t.1} parent=0 // pred_check_branch
    %19 = sbr.rel (0) target = $region21
  $region20: #{qnet_forward_t.1} parent=0 // pred_region
    _
  $region21: #{qnet_forward_t.1} parent=0 // pred_fallthru
    _
  %v20 = vld [vmem:[%s0] sm:$0xff]
  %v21 = vld [vmem:[%s1] sm:$0xff]
  %v22 = vld [vmem:[%s1 + $0x8] sm:$0xff]
  %v23 = vld [vmem:[%s1 + $0x10] sm:$0xff]
  %v24 = vld [vmem:[%s1 + $0x18] sm:$0xff]
  %v25 = vld [vmem:[%s2] sm:$0xff]
  %v26 = vld [vmem:[%s2 + $0x8] sm:$0xff]
  %v27 = vld [vmem:[%s2 + $0x10] sm:$0xff]
  %v28 = vld [vmem:[%s2 + $0x18] sm:$0xff]
  %30 = vset.pattern.permute.xlu0 0
  %31 = vperm.xlu0 %30, %v25
  %v32 = vpop.permute.xlu0 %31
  %35 = vset.pattern.permute.xlu0 0
  %36 = vperm.xlu0 %35, %v26
  %v37 = vpop.permute.xlu0 %36
  %40 = vset.pattern.permute.xlu0 0
  %41 = vperm.xlu0 %40, %v27
  %v42 = vpop.permute.xlu0 %41
  %45 = vset.pattern.permute.xlu0 0
  %46 = vperm.xlu0 %45, %v28
  %v47 = vpop.permute.xlu0 %46
  %vm49 = vcmask 64512
  %v51 = vsel %vm49, %v21, 0
  %v54 = vsel %vm49, %v22, 0
  %v57 = vsel %vm49, %v23, 0
  %v60 = vsel %vm49, %v24, 0
  %62 = vmatprep.subr.mxu0 0.0
  %63 = vmatpush1.msra.mxu0 0.0
  %64 = vmatprep.subr.mxu0 0.0
  %65 = vmatpush1.msra.mxu0 0.0
  %66 = vmatprep.subr.mxu0 0.0
  %67 = vmatpush1.msra.mxu0 0.0
  %68 = vmatprep.subr.mxu0 0.0
  %69 = vmatpush1.msra.mxu0 0.0
  %70 = vmatprep.subr.mxu0 0.0
  %71 = vmatpush1.msra.mxu0 0.0
  %72 = vmatprep.subr.mxu0 0.0
  %73 = vmatpush1.msra.mxu0 0.0
  %74 = vmatprep.subr.mxu0 0.0
  %75 = vmatpush1.msra.mxu0 0.0
  %76 = vmatprep.subr.mxu0 0.0
  %77 = vmatpush1.msra.mxu0 0.0
  %78 = vmatprep.subr.mxu0 0.0
  %79 = vmatpush1.msra.mxu0 0.0
  %80 = vmatprep.subr.mxu0 0.0
  %81 = vmatpush1.msra.mxu0 0.0
  %82 = vmatprep.subr.mxu0 0.0
  %83 = vmatpush1.msra.mxu0 0.0
  %84 = vmatprep.subr.mxu0 0.0
  %85 = vmatpush1.msra.mxu0 0.0
  %86 = vmatprep.subr.mxu0 0.0
  %87 = vmatpush1.msra.mxu0 0.0
  %88 = vmatprep.subr.mxu0 0.0
  %89 = vmatpush1.msra.mxu0 0.0
  %90 = vmatprep.subr.mxu0 0.0
  %91 = vmatpush1.msra.mxu0 0.0
  %92 = vmatprep.subr.mxu0 0.0
  %93 = vmatpush1.msra.mxu0 %v20
  %94 = vmatprep.subr.mxu0 0.0
  %95 = vmatpush2.msra.mxu0 0.0
  %96 = vmatprep.subr.mxu0 0.0
  %97 = vmatpush2.msra.mxu0 0.0
  %98 = vmatprep.subr.mxu0 0.0
  %99 = vmatpush2.msra.mxu0 0.0
  %100 = vmatprep.subr.mxu0 0.0
  %101 = vmatpush2.msra.mxu0 0.0
  %102 = vmatprep.subr.mxu0 0.0
  %103 = vmatpush2.msra.mxu0 0.0
  %104 = vmatprep.subr.mxu0 0.0
  %105 = vmatpush2.msra.mxu0 0.0
  %106 = vmatprep.subr.mxu0 0.0
  %107 = vmatpush2.msra.mxu0 0.0
  %108 = vmatprep.subr.mxu0 0.0
  %109 = vmatpush2.msra.mxu0 0.0
  %110 = vmatprep.subr.mxu0 0.0
  %111 = vmatpush2.msra.mxu0 0.0
  %112 = vmatprep.subr.mxu0 0.0
  %113 = vmatpush2.msra.mxu0 0.0
  %114 = vmatprep.subr.mxu0 0.0
  %115 = vmatpush2.msra.mxu0 0.0
  %116 = vmatprep.subr.mxu0 0.0
  %117 = vmatpush2.msra.mxu0 0.0
  %118 = vmatprep.subr.mxu0 0.0
  %119 = vmatpush2.msra.mxu0 0.0
  %120 = vmatprep.subr.mxu0 0.0
  %121 = vmatpush2.msra.mxu0 0.0
  %122 = vmatprep.subr.mxu0 0.0
  %123 = vmatpush2.msra.mxu0 0.0
  %124 = vmatprep.subr.mxu0 0.0
  %125 = vmatpush2.msra.mxu0 0.0
  %126 = vmatprep.mubr.f32.mxu0 0.0
  %127 = vmatmul.mubr.f32.gmra.mxu0 %v51
  %v128 = vpop.f32.mrf.mxu0
  %v129 = vadd.f32 %v32, %v128
  %v130 = vpop.f32.mrf.mxu0
  %131 = vmatprep.mubr.f32.mxu0 0.0
  %132 = vmatmul.mubr.f32.gmra.mxu0 %v54
  %v133 = vpop.f32.mrf.mxu0
  %v134 = vadd.f32 %v37, %v133
  %v135 = vpop.f32.mrf.mxu0
  %136 = vmatprep.mubr.f32.mxu0 0.0
  %137 = vmatmul.mubr.f32.gmra.mxu0 %v57
  %v138 = vpop.f32.mrf.mxu0
  %v139 = vadd.f32 %v42, %v138
  %v140 = vpop.f32.mrf.mxu0
  %141 = vmatprep.mubr.f32.mxu0 0.0
  %142 = vmatmul.mubr.f32.gmra.mxu0 %v60
  %v143 = vpop.f32.mrf.mxu0
  %v144 = vadd.f32 %v47, %v143
  %v145 = vpop.f32.mrf.mxu0
  %146 = vdwg.mxu0
  %v147 = vmax.f32 %v129, 0.0
  %v148 = vmax.f32 %v134, 0.0
  %v149 = vmax.f32 %v139, 0.0
  %v150 = vmax.f32 %v144, 0.0
  %v151 = vld [vmem:[%s3] sm:$0xf]
  %v152 = vld [vmem:[%s4] sm:$0xf]
  %154 = vset.pattern.permute.xlu0 0
  %155 = vperm.xlu0 %154, %v152
  %v156 = vpop.permute.xlu0 %155
  %vm158 = vcmask 261120
  %v160 = vsel %vm158, %v151, 0
  %162 = vmatprep.subr.mxu0 0.0
  %163 = vmatpush1.msra.mxu0 0.0
  %164 = vmatprep.subr.mxu0 0.0
  %165 = vmatpush1.msra.mxu0 0.0
  %166 = vmatprep.subr.mxu0 0.0
  %167 = vmatpush1.msra.mxu0 0.0
  %168 = vmatprep.subr.mxu0 0.0
  %169 = vmatpush1.msra.mxu0 0.0
  %170 = vmatprep.subr.mxu0 0.0
  %171 = vmatpush1.msra.mxu0 0.0
  %172 = vmatprep.subr.mxu0 0.0
  %173 = vmatpush1.msra.mxu0 0.0
  %174 = vmatprep.subr.mxu0 0.0
  %175 = vmatpush1.msra.mxu0 0.0
  %176 = vmatprep.subr.mxu0 0.0
  %177 = vmatpush1.msra.mxu0 0.0
  %178 = vmatprep.subr.mxu0 0.0
  %179 = vmatpush1.msra.mxu0 0.0
  %180 = vmatprep.subr.mxu0 0.0
  %181 = vmatpush1.msra.mxu0 0.0
  %182 = vmatprep.subr.mxu0 0.0
  %183 = vmatpush1.msra.mxu0 0.0
  %184 = vmatprep.subr.mxu0 0.0
  %185 = vmatpush1.msra.mxu0 0.0
  %186 = vmatprep.subr.mxu0 0.0
  %187 = vmatpush1.msra.mxu0 %v150
  %188 = vmatprep.subr.mxu0 0.0
  %189 = vmatpush1.msra.mxu0 %v149
  %190 = vmatprep.subr.mxu0 0.0
  %191 = vmatpush1.msra.mxu0 %v148
  %192 = vmatprep.subr.mxu0 0.0
  %193 = vmatpush1.msra.mxu0 %v147
  %194 = vmatprep.subr.mxu0 0.0
  %195 = vmatpush2.msra.mxu0 0.0
  %196 = vmatprep.subr.mxu0 0.0
  %197 = vmatpush2.msra.mxu0 0.0
  %198 = vmatprep.subr.mxu0 0.0
  %199 = vmatpush2.msra.mxu0 0.0
  %200 = vmatprep.subr.mxu0 0.0
  %201 = vmatpush2.msra.mxu0 0.0
  %202 = vmatprep.subr.mxu0 0.0
  %203 = vmatpush2.msra.mxu0 0.0
  %204 = vmatprep.subr.mxu0 0.0
  %205 = vmatpush2.msra.mxu0 0.0
  %206 = vmatprep.subr.mxu0 0.0
  %207 = vmatpush2.msra.mxu0 0.0
  %208 = vmatprep.subr.mxu0 0.0
  %209 = vmatpush2.msra.mxu0 0.0
  %210 = vmatprep.subr.mxu0 0.0
  %211 = vmatpush2.msra.mxu0 0.0
  %212 = vmatprep.subr.mxu0 0.0
  %213 = vmatpush2.msra.mxu0 0.0
  %214 = vmatprep.subr.mxu0 0.0
  %215 = vmatpush2.msra.mxu0 0.0
  %216 = vmatprep.subr.mxu0 0.0
  %217 = vmatpush2.msra.mxu0 0.0
  %218 = vmatprep.subr.mxu0 0.0
  %219 = vmatpush2.msra.mxu0 0.0
  %220 = vmatprep.subr.mxu0 0.0
  %221 = vmatpush2.msra.mxu0 0.0
  %222 = vmatprep.subr.mxu0 0.0
  %223 = vmatpush2.msra.mxu0 0.0
  %224 = vmatprep.subr.mxu0 0.0
  %225 = vmatpush2.msra.mxu0 0.0
  %226 = vmatprep.mubr.f32.mxu0 0.0
  %227 = vmatmul.mubr.f32.gmra.mxu0 %v160
  %v228 = vpop.f32.mrf.mxu0
  %v229 = vadd.f32 %v156, %v228
  %v230 = vpop.f32.mrf.mxu0
  %231 = vdwg.mxu0
  %vm232 = vcmask 11264
  %233 = vst.msk [vmem:[%s5] sm:$0xf] %vm232, %v229
  // Predicated region
  $region22: #{qnet_forward_t.1} parent=0 // pred_check
    _
  $region23: #{qnet_forward_t.1} parent=0 // pred_check_branch
    %235 = sbr.rel (0) target = $region25
  $region24: #{qnet_forward_t.1} parent=0 // pred_region
    _
  $region25: #{qnet_forward_t.1} parent=0 // pred_fallthru
    _
  // Predicated region
  $region26: #{qnet_forward_t.1} parent=0 // pred_check
    _
  $region27: #{qnet_forward_t.1} parent=0 // pred_check_branch
    %237 = sbr.rel (0) target = $region29
  $region28: #{qnet_forward_t.1} parent=0 // pred_region
    _
  $region29: #{qnet_forward_t.1} parent=0 // pred_fallthru
    _

</llo_original>
